<compile_context>
chip_gen: v5e
topology: v5e:2x2
jax: 0.10.0
libtpu: 0.0.40
codegen_flags: <defaults>
</compile_context>

<pallas_src>
import functools

import jax
import jax.numpy as jnp
from jax.experimental import pallas as pl
from jax.experimental.pallas import tpu as pltpu

MAX_RATING = 5.0
MIN_RATING = 0.5
_SCALE = MAX_RATING - MIN_RATING + 1.0   # 5.5
_SHIFT = MIN_RATING - 0.5                # 0.0


def _mlp_kernel(u_ref, m_ref, w1u_ref, w1m_ref, b1_ref, w2_ref, b2_ref, o_ref):
    """Fused MLP head on the transposed (feature, batch-tile) layout.

    u_ref, m_ref : (F, TB)  f32 -- gathered embeddings, batch on lanes
    w1u, w1m     : (H, F)   f32 -- the two halves of lin1's weight
    b1           : (H, 1)   f32
    w2           : (H, 1)   f32 -- lin2 weight as a column
    b2           : (1, 1)   f32
    o_ref        : (1, TB)  f32 -- lane-dense output row
    """
    # lin1 (+ ReLU):  h^T = W1u @ u^T + W1m @ m^T + b1   -> (H, TB)
    h = jnp.dot(w1u_ref[...], u_ref[...], preferred_element_type=jnp.float32)
    h = h + jnp.dot(w1m_ref[...], m_ref[...], preferred_element_type=jnp.float32)
    h = jnp.maximum(h + b1_ref[...], 0.0)

    # lin2 (hidden -> 1) as VPU multiply + sublane (XLU) reduce over H.
    y = jnp.sum(h * w2_ref[...], axis=0, keepdims=True) + b2_ref[...]   # (1, TB)

    # sigmoid(y) * (max - min + 1) + (min - 0.5)
    o_ref[...] = jax.nn.sigmoid(y) * _SCALE + _SHIFT
    # TODO(synk): training-mode Dropout (p1, p2) is not implemented; eval-mode
    # (identity) semantics are reproduced here.


def _round_up(x, m):
    return ((x + m - 1) // m) * m


def _vmem_limit_bytes(n_factors, hidden, tb):
    """Explicit scoped-VMEM budget for the chosen tile size (2x headroom)."""
    f_sub = _round_up(n_factors, 8)
    h_sub = _round_up(hidden, 8)
    stream = 2 * 2 * f_sub * tb * 4          # u_t, m_t f32 tiles, double-buffered
    outbuf = 2 * 8 * tb * 4                  # (1, tb) f32 output, double-buffered
    temps = 4 * h_sub * tb * 4               # h + dot-result f32 temporaries
    weights = 4 * 2 * h_sub * 128 * 4 + 3 * 2 * 8 * 128 * 4   # resident params (generous)
    est = stream + outbuf + temps + weights
    # Floor at the common 32 MiB default, cap below v7x's 64 MiB physical VMEM.
    return int(min(max(2 * est, 32 * 1024 * 1024), 64 * 1024 * 1024))


@functools.partial(jax.jit, static_argnames=("block_b",))
def movielens_forward(user_ids, movie_ids, params, block_b=8192):
    """Embedding gather (cheap XLA glue) + fused batch-tiled Pallas MLP head."""
    u_emb = params["u_emb"]                       # (n_users,  F) f32, row-major
    m_emb = params["m_emb"]                       # (n_movies, F) f32, row-major
    w1u, w1m = params["w1u"], params["w1m"]       # (H, F) f32 each
    b1, w2, b2 = params["b1"], params["w2"], params["b2"]

    F = u_emb.shape[1]
    H = w1u.shape[0]
    B = user_ids.shape[0]

    # --- Batch tiling -------------------------------------------------------
    # block_b: multiple of 128 (lane-dense stores), capped so the double-
    # buffered working set stays well under v7x's 64 MiB physical VMEM.
    block_b = _round_up(max(int(block_b), 128), 128)
    block_b = min(block_b, 32768)

    b128 = _round_up(B, 128)
    tb0 = min(block_b, b128)
    n_tiles = pl.cdiv(b128, tb0)
    if n_tiles == 1 and b128 >= 256:
        n_tiles = 2                                # keep both v7x TensorCores busy
    tb = _round_up(pl.cdiv(b128, n_tiles), 128)    # balanced tiles, minimal padding
    n_tiles = pl.cdiv(b128, tb)
    b_pad = n_tiles * tb

    # --- Embedding gather (== nn.Embedding lookups) -------------------------
    # Row-major axis-0 gather (contiguous 4*F-byte rows -> cheap XLA lowering),
    # then one small transpose pass to the batch-on-lanes (F, b_pad) layout.
    pad = b_pad - B
    uid = jnp.pad(user_ids, (0, pad))              # index 0 is a valid row
    mid = jnp.pad(movie_ids, (0, pad))
    u_t = jnp.take(u_emb, uid, axis=0).T           # (F, b_pad) f32
    m_t = jnp.take(m_emb, mid, axis=0).T           # (F, b_pad) f32

    def _resident(shape):                          # weights: DMA'd once, VMEM-resident
        return pl.BlockSpec(shape, lambda i: (0, 0))

    cost = pl.CostEstimate(
        flops=2 * b_pad * (2 * F + 1) * H,
        transcendentals=b_pad,
        bytes_accessed=2 * F * b_pad * 4 + b_pad * 4 + (2 * H * F + 2 * H + 1) * 4,
    )

    out = pl.pallas_call(
        _mlp_kernel,
        out_shape=jax.ShapeDtypeStruct((1, b_pad), jnp.float32),
        grid=(n_tiles,),
        in_specs=[
            pl.BlockSpec((F, tb), lambda i: (0, i)),   # u_t  (streamed)
            pl.BlockSpec((F, tb), lambda i: (0, i)),   # m_t  (streamed)
            _resident((H, F)),                         # w1u
            _resident((H, F)),                         # w1m
            _resident((H, 1)),                         # b1
            _resident((H, 1)),                         # w2
            _resident((1, 1)),                         # b2
        ],
        out_specs=pl.BlockSpec((1, tb), lambda i: (0, i)),
        compiler_params=pltpu.CompilerParams(
            dimension_semantics=("parallel",),
            vmem_limit_bytes=_vmem_limit_bytes(F, H, tb),
        ),
        cost_estimate=cost,
    )(u_t, m_t, w1u, w1m, b1, w2, b2)

    return out[0, :B].reshape(B, 1)


def init_params(key, n_users, n_movies, n_factors, hidden):
    """Parameter init mirroring the PyTorch module's shapes (all float32).

    Embedding tables ~ U(0, 0.05), stored ROW-MAJOR (vocab, F).
    W1: (H, 2F) split into W1u/W1m; b1: (H, 1); W2 stored as a column (H, 1).
    """
    k_u, k_m, k_w1, k_b1, k_w2, k_b2 = jax.random.split(key, 6)
    u_emb = jax.random.uniform(k_u, (n_users, n_factors), jnp.float32, 0.0, 0.05)
    m_emb = jax.random.uniform(k_m, (n_movies, n_factors), jnp.float32, 0.0, 0.05)
    fan_in1 = 2 * n_factors
    lim1 = 1.0 / (fan_in1 ** 0.5)
    w1 = jax.random.uniform(k_w1, (hidden, fan_in1), jnp.float32, -lim1, lim1)
    b1 = jax.random.uniform(k_b1, (hidden, 1), jnp.float32, -lim1, lim1)
    lim2 = 1.0 / (hidden ** 0.5)
    w2 = jax.random.uniform(k_w2, (hidden, 1), jnp.float32, -lim2, lim2)
    b2 = jax.random.uniform(k_b2, (1, 1), jnp.float32, -lim2, lim2)
    return {
        "u_emb": u_emb, "m_emb": m_emb,
        "w1u": w1[:, :n_factors], "w1m": w1[:, n_factors:],
        "b1": b1, "w2": w2, "b2": b2,
    }


def reference_forward(user_ids, movie_ids, params):
    """Pure-JAX reference (same math, PyTorch-style row-major layout)."""
    u = jnp.take(params["u_emb"], user_ids, axis=0)                       # (B, F)
    m = jnp.take(params["m_emb"], movie_ids, axis=0)                      # (B, F)
    x = jnp.concatenate([u, m], axis=1)                                   # (B, 2F)
    w1 = jnp.concatenate([params["w1u"], params["w1m"]], axis=1)          # (H, 2F)
    h = jnp.maximum(x @ w1.T + params["b1"][:, 0], 0.0)                   # (B, H)
    y = h @ params["w2"] + params["b2"][0, 0]                             # (B, 1)
    return jax.nn.sigmoid(y) * _SCALE + _SHIFT


if __name__ == "__main__":
    # Small, forward-consistent shapes (module defaults: n_factors=10, hidden=10).
    B = 8
    N_FACTORS = 10
    HIDDEN = 10
    N_USERS = 32
    N_MOVIES = 64

    key = jax.random.PRNGKey(0)
    k_params, k_uid, k_mid = jax.random.split(key, 3)
    params = init_params(k_params, N_USERS, N_MOVIES, N_FACTORS, HIDDEN)

    user_ids = jax.random.randint(k_uid, (B,), 0, N_USERS, dtype=jnp.int32)
    movie_ids = jax.random.randint(k_mid, (B,), 0, N_MOVIES, dtype=jnp.int32)

    out = jax.block_until_ready(movielens_forward(user_ids, movie_ids, params))
    ref = reference_forward(user_ids, movie_ids, params)
    assert out.shape == (B, 1), out.shape
    assert jnp.allclose(out, ref, atol=1e-3, rtol=1e-3), (out, ref)

    # Ragged batch with a small explicit tile: exercises padding + multi-tile grid.
    B2 = 200
    k_uid2, k_mid2 = jax.random.split(k_uid)
    uid2 = jax.random.randint(k_uid2, (B2,), 0, N_USERS, dtype=jnp.int32)
    mid2 = jax.random.randint(k_mid2, (B2,), 0, N_MOVIES, dtype=jnp.int32)
    out2 = jax.block_until_ready(
        movielens_forward(uid2, mid2, params, block_b=128))
    ref2 = reference_forward(uid2, mid2, params)
    assert out2.shape == (B2, 1), out2.shape
    assert jnp.allclose(out2, ref2, atol=1e-3, rtol=1e-3), (out2, ref2)

    # Default-path check: big tile cap, batch split into >= 2 balanced tiles.
    B3 = 1000
    k_uid3, k_mid3 = jax.random.split(k_mid)
    uid3 = jax.random.randint(k_uid3, (B3,), 0, N_USERS, dtype=jnp.int32)
    mid3 = jax.random.randint(k_mid3, (B3,), 0, N_MOVIES, dtype=jnp.int32)
    out3 = jax.block_until_ready(movielens_forward(uid3, mid3, params))
    ref3 = reference_forward(uid3, mid3, params)
    assert out3.shape == (B3, 1), out3.shape
    assert jnp.allclose(out3, ref3, atol=1e-3, rtol=1e-3), (out3, ref3)

    print("KERNEL_OK")
</pallas_src>

<mosaic_0001>
module attributes {stable_mosaic.version = 11 : i64} {
  func.func @_mlp_kernel(%arg0: i32, %arg1: memref<10x128xf32, #tpu.memory_space<vmem>>, %arg2: memref<10x128xf32, #tpu.memory_space<vmem>>, %arg3: memref<10x10xf32, #tpu.memory_space<vmem>>, %arg4: memref<10x10xf32, #tpu.memory_space<vmem>>, %arg5: memref<10x1xf32, #tpu.memory_space<vmem>>, %arg6: memref<10x1xf32, #tpu.memory_space<vmem>>, %arg7: memref<1x1xf32, #tpu.memory_space<vmem>>, %arg8: memref<1x128xf32, #tpu.memory_space<vmem>>) attributes {dimension_semantics = [#tpu.dimension_semantics<parallel>], iteration_bounds = array<i64: 1>, scalar_prefetch = 0 : i64, scratch_operands = 0 : i64, tpu.core_type = #tpu.core_type<tc>, window_params = [{transform_indices = @transform_0, window_bounds = array<i64: 10, 128>}, {transform_indices = @transform_1, window_bounds = array<i64: 10, 128>}, {pipeline_mode = #tpu.pipeline_mode<synchronous>, transform_indices = @transform_2, window_bounds = array<i64: 10, 10>}, {pipeline_mode = #tpu.pipeline_mode<synchronous>, transform_indices = @transform_3, window_bounds = array<i64: 10, 10>}, {pipeline_mode = #tpu.pipeline_mode<synchronous>, transform_indices = @transform_4, window_bounds = array<i64: 10, 1>}, {pipeline_mode = #tpu.pipeline_mode<synchronous>, transform_indices = @transform_5, window_bounds = array<i64: 10, 1>}, {pipeline_mode = #tpu.pipeline_mode<synchronous>, transform_indices = @transform_6, window_bounds = array<i64: 1, 1>}, {transform_indices = @transform_7, window_bounds = array<i64: 1, 128>}]} {
    %c0 = arith.constant 0 : index
    %c0_0 = arith.constant 0 : index
    %0 = vector.load %arg3[%c0, %c0_0] : memref<10x10xf32, #tpu.memory_space<vmem>>, vector<10x10xf32>
    %c0_1 = arith.constant 0 : index
    %c0_2 = arith.constant 0 : index
    %1 = vector.load %arg1[%c0_1, %c0_2] : memref<10x128xf32, #tpu.memory_space<vmem>>, vector<10x128xf32>
    %cst = arith.constant dense<0.000000e+00> : vector<10x128xf32>
    %2 = tpu.matmul %0, %1, %cst {dimension_numbers = #tpu.dot_dimension_numbers<[1], [0], [0], [1], [0, 0, 1, 1], [], []>} : vector<10x10xf32>, vector<10x128xf32>, vector<10x128xf32> -> vector<10x128xf32>
    %c0_3 = arith.constant 0 : index
    %c0_4 = arith.constant 0 : index
    %3 = vector.load %arg4[%c0_3, %c0_4] : memref<10x10xf32, #tpu.memory_space<vmem>>, vector<10x10xf32>
    %c0_5 = arith.constant 0 : index
    %c0_6 = arith.constant 0 : index
    %4 = vector.load %arg2[%c0_5, %c0_6] : memref<10x128xf32, #tpu.memory_space<vmem>>, vector<10x128xf32>
    %cst_7 = arith.constant dense<0.000000e+00> : vector<10x128xf32>
    %5 = tpu.matmul %3, %4, %cst_7 {dimension_numbers = #tpu.dot_dimension_numbers<[1], [0], [0], [1], [0, 0, 1, 1], [], []>} : vector<10x10xf32>, vector<10x128xf32>, vector<10x128xf32> -> vector<10x128xf32>
    %6 = arith.addf %2, %5 : vector<10x128xf32>
    %c0_8 = arith.constant 0 : index
    %c0_9 = arith.constant 0 : index
    %7 = vector.load %arg5[%c0_8, %c0_9] : memref<10x1xf32, #tpu.memory_space<vmem>>, vector<10x1xf32>
    %8 = vector.broadcast %7 : vector<10x1xf32> to vector<10x128xf32>
    %9 = arith.addf %6, %8 : vector<10x128xf32>
    %cst_10 = arith.constant 0.000000e+00 : f32
    %10 = vector.broadcast %cst_10 : f32 to vector<10x128xf32>
    %11 = arith.maximumf %9, %10 : vector<10x128xf32>
    %c0_11 = arith.constant 0 : index
    %c0_12 = arith.constant 0 : index
    %12 = vector.load %arg6[%c0_11, %c0_12] : memref<10x1xf32, #tpu.memory_space<vmem>>, vector<10x1xf32>
    %13 = vector.broadcast %12 : vector<10x1xf32> to vector<10x128xf32>
    %14 = arith.mulf %11, %13 : vector<10x128xf32>
    %cst_13 = arith.constant dense<0.000000e+00> : vector<128xf32>
    %15 = vector.multi_reduction <add>, %14, %cst_13 [0] : vector<10x128xf32> to vector<128xf32>
    %16 = vector.shape_cast %15 : vector<128xf32> to vector<1x128xf32>
    %c0_14 = arith.constant 0 : index
    %c0_15 = arith.constant 0 : index
    %17 = vector.load %arg7[%c0_14, %c0_15] : memref<1x1xf32, #tpu.memory_space<vmem>>, vector<1x1xf32>
    %18 = vector.broadcast %17 : vector<1x1xf32> to vector<1x128xf32>
    %19 = arith.addf %16, %18 : vector<1x128xf32>
    %20 = arith.negf %19 : vector<1x128xf32>
    %21 = math.exp %20 : vector<1x128xf32>
    %cst_16 = arith.constant 1.000000e+00 : f32
    %22 = vector.broadcast %cst_16 : f32 to vector<1x128xf32>
    %23 = arith.addf %22, %21 : vector<1x128xf32>
    %24 = arith.divf %22, %23 : vector<1x128xf32>
    %cst_17 = arith.constant 5.500000e+00 : f32
    %25 = vector.broadcast %cst_17 : f32 to vector<1x128xf32>
    %26 = arith.mulf %24, %25 : vector<1x128xf32>
    %cst_18 = arith.constant 0.000000e+00 : f32
    %27 = vector.broadcast %cst_18 : f32 to vector<1x128xf32>
    %28 = arith.addf %26, %27 : vector<1x128xf32>
    %c0_19 = arith.constant 0 : index
    %c0_20 = arith.constant 0 : index
    %29 = vector.load %arg8[%c0_19, %c0_20] : memref<1x128xf32, #tpu.memory_space<vmem>>, vector<1x128xf32>
    tpu.vector_store %arg8[%c0_19, %c0_20], %28 {strides = array<i32>} : memref<1x128xf32, #tpu.memory_space<vmem>>, vector<1x128xf32>,
    return
  }
  func.func @transform_0(%arg0: i32) -> (i32, i32) {
    %c0_i32 = arith.constant 0 : i32
    %c0_i32_0 = arith.constant 0 : i32
    return %c0_i32, %arg0 : i32, i32
  }
  func.func @transform_1(%arg0: i32) -> (i32, i32) {
    %c0_i32 = arith.constant 0 : i32
    %c0_i32_0 = arith.constant 0 : i32
    return %c0_i32, %arg0 : i32, i32
  }
  func.func @transform_2(%arg0: i32) -> (i32, i32) {
    %c0_i32 = arith.constant 0 : i32
    %c0_i32_0 = arith.constant 0 : i32
    %c0_i32_1 = arith.constant 0 : i32
    return %c0_i32, %c0_i32_0 : i32, i32
  }
  func.func @transform_3(%arg0: i32) -> (i32, i32) {
    %c0_i32 = arith.constant 0 : i32
    %c0_i32_0 = arith.constant 0 : i32
    %c0_i32_1 = arith.constant 0 : i32
    return %c0_i32, %c0_i32_0 : i32, i32
  }
  func.func @transform_4(%arg0: i32) -> (i32, i32) {
    %c0_i32 = arith.constant 0 : i32
    %c0_i32_0 = arith.constant 0 : i32
    %c0_i32_1 = arith.constant 0 : i32
    return %c0_i32, %c0_i32_0 : i32, i32
  }
  func.func @transform_5(%arg0: i32) -> (i32, i32) {
    %c0_i32 = arith.constant 0 : i32
    %c0_i32_0 = arith.constant 0 : i32
    %c0_i32_1 = arith.constant 0 : i32
    return %c0_i32, %c0_i32_0 : i32, i32
  }
  func.func @transform_6(%arg0: i32) -> (i32, i32) {
    %c0_i32 = arith.constant 0 : i32
    %c0_i32_0 = arith.constant 0 : i32
    %c0_i32_1 = arith.constant 0 : i32
    return %c0_i32, %c0_i32_0 : i32, i32
  }
  func.func @transform_7(%arg0: i32) -> (i32, i32) {
    %c0_i32 = arith.constant 0 : i32
    %c0_i32_0 = arith.constant 0 : i32
    return %c0_i32, %arg0 : i32, i32
  }
}

</mosaic_0001>

<llo_original>
// kernel: movielens_forward.1
$region0: #{movielens_forward.1}
  #allocation0 [shape = 'u32[]', space=smem, size = 0x4, offset = 0x4, fixed_abs, tag = 'smem constant byte address 0x4 - core index']
  #allocation1 [shape = 'u32[72,128]{1,0:T(1,128)}', space=vmem, size = 0x9000, scoped, tag = 'internal scratch']
  #allocation2 [shape = 'f32[1,1]{1,0:T(1,128)S(1)}', space=vmem, size = 0x200, scoped, tag = 'scoped memory for movielens_forward.1']
  %s0 = inlined_call_operand.vmem [shape: f32[10,128], index: 0, kind: input, shape index: {}]
  %s1 = inlined_call_operand.vmem [shape: f32[10,128], index: 1, kind: input, shape index: {}]
  %s2 = inlined_call_operand.vmem [shape: f32[10,10], index: 2, kind: input, shape index: {}]
  %s3 = inlined_call_operand.vmem [shape: f32[10,10], index: 3, kind: input, shape index: {}]
  %s4 = inlined_call_operand.vmem [shape: f32[10,1], index: 4, kind: input, shape index: {}]
  %s5 = inlined_call_operand.vmem [shape: f32[10,1], index: 5, kind: input, shape index: {}]
  %s6 = inlined_call_operand.<no memory space> [shape: f32[1,1], index: 6, kind: input, shape index: {}]
  %s7 = inlined_call_operand.vmem [shape: f32[1,128], index: 7, kind: output, shape index: {}]
  %s8 = sld [smem:[#allocation0]]
  $region38: #{movielens_forward.1} parent=0
    _
  %s10 = ssub.s32 1, %s8
  %s11 = scalar_select 0, %s10, %s8
  %v12 = vstv %s6
  %13 = vst [vmem:[#allocation2] sm:$0x1] %v12
  // Predicated region
  $region2: #{movielens_forward.1} parent=0 // pred_check
    _
  $region3: #{movielens_forward.1} parent=0 // pred_check_branch
    %15 = sbr.rel (0) target = $region5
  $region4: #{movielens_forward.1} parent=0 // pred_region
    _
  $region5: #{movielens_forward.1} parent=0 // pred_fallthru
    _
  // Predicated region
  $region6: #{movielens_forward.1} parent=0 // pred_check
    _
  $region7: #{movielens_forward.1} parent=0 // pred_check_branch
    %17 = sbr.rel (0) target = $region9
  $region8: #{movielens_forward.1} parent=0 // pred_region
    _
  $region9: #{movielens_forward.1} parent=0 // pred_fallthru
    _
  // Predicated region
  $region10: #{movielens_forward.1} parent=0 // pred_check
    _
  $region11: #{movielens_forward.1} parent=0 // pred_check_branch
    %19 = sbr.rel (0) target = $region13
  $region12: #{movielens_forward.1} parent=0 // pred_region
    _
  $region13: #{movielens_forward.1} parent=0 // pred_fallthru
    _
  // Predicated region
  $region14: #{movielens_forward.1} parent=0 // pred_check
    _
  $region15: #{movielens_forward.1} parent=0 // pred_check_branch
    %21 = sbr.rel (0) target = $region17
  $region16: #{movielens_forward.1} parent=0 // pred_region
    _
  $region17: #{movielens_forward.1} parent=0 // pred_fallthru
    _
  // Predicated region
  $region18: #{movielens_forward.1} parent=0 // pred_check
    _
  $region19: #{movielens_forward.1} parent=0 // pred_check_branch
    %23 = sbr.rel (0) target = $region21
  $region20: #{movielens_forward.1} parent=0 // pred_region
    _
  $region21: #{movielens_forward.1} parent=0 // pred_fallthru
    _
  // Predicated region
  $region22: #{movielens_forward.1} parent=0 // pred_check
    _
  $region23: #{movielens_forward.1} parent=0 // pred_check_branch
    %25 = sbr.rel (0) target = $region25
  $region24: #{movielens_forward.1} parent=0 // pred_region
    _
  $region25: #{movielens_forward.1} parent=0 // pred_fallthru
    _
  // Predicated region
  $region26: #{movielens_forward.1} parent=0 // pred_check
    _
  $region27: #{movielens_forward.1} parent=0 // pred_check_branch
    %27 = sbr.rel (0) target = $region29
  $region28: #{movielens_forward.1} parent=0 // pred_region
    _
  $region29: #{movielens_forward.1} parent=0 // pred_fallthru
    _
  %v28 = vld [vmem:[%s2] sm:$0xff]
  %v29 = vld [vmem:[%s2 + $0x8] sm:$0x3]
  %v30 = vld [vmem:[%s0] sm:$0xff]
  %v31 = vld [vmem:[%s0 + $0x8] sm:$0x3]
  %v32 = vld [vmem:[%s3] sm:$0xff]
  %v33 = vld [vmem:[%s3 + $0x8] sm:$0x3]
  %v34 = vld [vmem:[%s1] sm:$0xff]
  %v35 = vld [vmem:[%s1 + $0x8] sm:$0x3]
  %vm36 = vcmask 80896
  %v38 = vsel %vm36, %v32, 0
  %v41 = vsel %vm36, %v33, 0
  %vm43 = vcmask 1041408
  %v45 = vsel %vm43, %v35, 0
  %47 = vmatpush.msra.mxu0 0.0
  %48 = vmatpush.msra.mxu0 0.0
  %49 = vmatpush.msra.mxu0 0.0
  %50 = vmatpush.msra.mxu0 0.0
  %51 = vmatpush.msra.mxu0 0.0
  %52 = vmatpush.msra.mxu0 0.0
  %53 = vmatpush.msra.mxu0 0.0
  %54 = vmatpush.msra.mxu0 0.0
  %55 = vmatpush.msra.mxu0 0.0
  %56 = vmatpush.msra.mxu0 0.0
  %57 = vmatpush.msra.mxu0 0.0
  %58 = vmatpush.msra.mxu0 0.0
  %59 = vmatpush.msra.mxu0 0.0
  %60 = vmatpush.msra.mxu0 0.0
  %61 = vmatpush.msra.mxu0 %v45
  %62 = vmatpush.msra.mxu0 %v34
  %63 = vmatmul.f32.gmra.mxu0 %v38
  %v64 = vpop.f32.mrf.mxu0
  %v65 = vadd.f32 0.0, %v64
  %66 = vmatmul.f32.gmra.mxu0 %v41
  %v67 = vpop.f32.mrf.mxu0
  %v68 = vadd.f32 0.0, %v67
  %69 = vdwg.mxu0
  %v71 = vsel %vm36, %v28, 0
  %v74 = vsel %vm36, %v29, 0
  %v77 = vsel %vm43, %v31, 0
  %79 = vmatpush.msra.mxu0 0.0
  %80 = vmatpush.msra.mxu0 0.0
  %81 = vmatpush.msra.mxu0 0.0
  %82 = vmatpush.msra.mxu0 0.0
  %83 = vmatpush.msra.mxu0 0.0
  %84 = vmatpush.msra.mxu0 0.0
  %85 = vmatpush.msra.mxu0 0.0
  %86 = vmatpush.msra.mxu0 0.0
  %87 = vmatpush.msra.mxu0 0.0
  %88 = vmatpush.msra.mxu0 0.0
  %89 = vmatpush.msra.mxu0 0.0
  %90 = vmatpush.msra.mxu0 0.0
  %91 = vmatpush.msra.mxu0 0.0
  %92 = vmatpush.msra.mxu0 0.0
  %93 = vmatpush.msra.mxu0 %v77
  %94 = vmatpush.msra.mxu0 %v30
  %95 = vmatmul.f32.gmra.mxu0 %v71
  %v96 = vpop.f32.mrf.mxu0
  %v97 = vadd.f32 %v65, %v96
  %98 = vmatmul.f32.gmra.mxu0 %v74
  %v99 = vpop.f32.mrf.mxu0
  %v100 = vadd.f32 %v68, %v99
  %101 = vdwg.mxu0
  %v102 = vld [vmem:[%s4] sm:$0xff]
  %v103 = vld [vmem:[%s4 + $0x8] sm:$0x3]
  %105 = vset.pattern.permute.xlu0 0
  %106 = vperm.xlu0 %105, %v102
  %v107 = vpop.permute.xlu0 %106
  %110 = vset.pattern.permute.xlu0 0
  %111 = vperm.xlu0 %110, %v103
  %v112 = vpop.permute.xlu0 %111
  %v114 = vadd.f32 %v97, %v107
  %v115 = vadd.f32 %v100, %v112
  %v116 = vmax.f32 %v114, 0.0
  %v117 = vmax.f32 %v115, 0.0
  %v118 = vld [vmem:[%s5] sm:$0xff]
  %v119 = vld [vmem:[%s5 + $0x8] sm:$0x3]
  %121 = vset.pattern.permute.xlu0 0
  %122 = vperm.xlu0 %121, %v118
  %v123 = vpop.permute.xlu0 %122
  %126 = vset.pattern.permute.xlu0 0
  %127 = vperm.xlu0 %126, %v119
  %v128 = vpop.permute.xlu0 %127
  %v130 = vmul.f32 %v116, %v123
  %v131 = vmul.f32 %v117, %v128
  %v132 = vsel %vm43, %v131, 0.0
  %v133 = vadd.f32 %v130, %v132
  %v134 = vrot.slane %v133, 4
  %v135 = vadd.f32 %v133, %v134
  %v136 = vrot.slane %v135, 2
  %v137 = vadd.f32 %v135, %v136
  %v138 = vrot.slane %v137, 1
  %v139 = vadd.f32 %v137, %v138
  %v140 = vld [vmem:[#allocation2] sm:$0x1]
  %142 = vset.pattern.permute.xlu0 0
  %143 = vperm.xlu0 %142, %v140
  %v144 = vpop.permute.xlu0 %143
  %v146 = vperm.slane %v144, 0
  %v147 = vadd.f32 %v139, %v146
  %v148 = vxor.u32 %v147, 2147483648
  %v149 = vmul.f32 %v148, 1.442695
  %v150 = vpow.pop %v149
  %v151 = vadd.f32 %v150, 1.0
  %v152 = vrcp.pop %v151
  %v153 = vmul.f32 %v151, %v152
  %v154 = vsub.f32 1.0, %v153
  %v155 = vmul.f32 %v152, %v154
  %v156 = vadd.f32 %v152, %v155
  %vm157 = vweird.f32 %v151
  %vm158 = vweird.f32 %v152
  %vm159 = vmor %vm157, %vm158
  %v160 = vsel %vm159, %v152, %v156
  %v161 = vand.u32 2147483647, %v151
  %vm162 = vcmp.eq.f32.partialorder %v161, 8.507059e+37
  %v163 = vand.u32 %v151, 2147483648
  %v164 = vor.u32 1.1754944e-38, %v163
  %v165 = vsel %vm162, %v164, %v160
  %v166 = vmul.f32 1.0, %v165
  %v167 = vmul.f32 %v166, 5.5
  %v168 = vadd.f32 %v167, 0.0
  %169 = vst [vmem:[%s7] sm:$0x1] %v168
  // Predicated region
  $region30: #{movielens_forward.1} parent=0 // pred_check
    _
  $region31: #{movielens_forward.1} parent=0 // pred_check_branch
    %171 = sbr.rel (0) target = $region33
  $region32: #{movielens_forward.1} parent=0 // pred_region
    _
  $region33: #{movielens_forward.1} parent=0 // pred_fallthru
    _
  // Predicated region
  $region34: #{movielens_forward.1} parent=0 // pred_check
    _
  $region35: #{movielens_forward.1} parent=0 // pred_check_branch
    %173 = sbr.rel (0) target = $region37
  $region36: #{movielens_forward.1} parent=0 // pred_region
    _
  $region37: #{movielens_forward.1} parent=0 // pred_fallthru
    _

</llo_original>
